<compile_context>
chip_gen: v5e
topology: v5e:2x2
jax: 0.10.0
libtpu: 0.0.40
codegen_flags: <defaults>
</compile_context>

<pallas_src>
import functools

import jax
import jax.numpy as jnp
from jax.experimental import pallas as pl
from jax.experimental.pallas import tpu as pltpu


_NEG_FLOOR = -10000.0  # matches "- one_hot * 10000.0" in the PyTorch module


def _round_up(x, m):
    return ((x + m - 1) // m) * m


def _vmem_capacity_bytes():
    """Generation-aware VMEM size; conservative (v7x per-TC) fallback."""
    try:
        info = pltpu.get_tpu_info()
        cap = getattr(info, "vmem_capacity_bytes", None)
        if cap:
            return int(cap)
    except Exception:
        pass
    return 64 * 1024 * 1024


def _pick_block_rows(batch, num_classes, elem_bytes, block_cap_bytes):
    """Row-tile size: ~4 MiB blocks (≈86% of HBM roofline), up to the
    per-generation cap for large K, and >=2 grid steps when B allows it."""
    row_bytes = max(1, num_classes * elem_bytes)
    tb = ((4 * 1024 * 1024) // row_bytes) // 8 * 8
    if tb < 256:  # large-K shapes: allow up to the generation block cap
        tb = (block_cap_bytes // row_bytes) // 8 * 8
    tb = max(8, tb)
    tb = min(tb, _round_up(batch, 8))
    if batch > 8:
        # Guarantee at least 2 grid steps so both v7x TensorCores get work.
        tb = min(tb, _round_up((batch + 1) // 2, 8))
    return max(8, tb)


def _adv_loss_kernel(logits_ref, tgt_ref, loss_ref, *, kappa, num_valid_rows,
                     tb, k):
    i = pl.program_id(0)

    # Native-dtype DMA; upcast to f32 in-register so the -1e4 floor and the
    # compare/select/reductions stay bit-equal to the f32 reference.
    logits = logits_ref[...].astype(jnp.float32)                # (tb, K)

    # Targets are resident (untiled) in VMEM; slice this step's rows.
    start = pl.multiple_of(i * tb, 8)
    tgt = tgt_ref[pl.ds(start, tb), :]                          # (tb, 1) int32

    col = jax.lax.broadcasted_iota(jnp.int32, (tb, k), 1)       # lane index
    is_target = col == tgt                                      # (tb, K) bool

    # real: logit at the labeled class (exactly one lane matches per valid row).
    real = jnp.sum(jnp.where(is_target, logits, 0.0), axis=1, keepdims=True)
    # other: max over non-target logits, with PyTorch's -1e4 at the target lane.
    other = jnp.max(jnp.where(is_target, _NEG_FLOOR, logits), axis=1,
                    keepdims=True)
    loss = jnp.maximum(real - other + kappa, 0.0)               # (tb, 1)

    # Rows past the true batch (partial last block) are zeroed; their stores
    # are out of bounds and discarded by Pallas anyway.
    row = i * tb + jax.lax.broadcasted_iota(jnp.int32, (tb, 1), 0)
    loss_ref[...] = jnp.where(row < num_valid_rows, loss, 0.0).astype(
        loss_ref.dtype)


def untargeted_logits_adv_loss(logits, targets, kappa=0.0):
    """Pallas implementation of UntargetedLogitsAdvLoss.forward.

    Args:
      logits:  [B, K] float array of network logits (f32 or bf16).
      targets: [B] (or [B, 1]) integer class labels in [0, K).
      kappa:   python float margin (module __init__ arg).
    Returns:
      scalar float32: mean hinge adversarial loss over the batch.
    """
    B, K = logits.shape
    if targets.ndim == 1:
        targets = targets.reshape(-1, 1)
    targets = targets.astype(jnp.int32)

    elem_bytes = jnp.dtype(logits.dtype).itemsize
    vmem_cap = _vmem_capacity_bytes()
    # v5e/v6e have 128 MiB VMEM -> allow bigger blocks; v7x has 64 MiB per TC.
    block_cap = 16 * 1024 * 1024 if vmem_cap >= 100 * 1024 * 1024 \
        else 8 * 1024 * 1024

    tb = _pick_block_rows(B, K, elem_bytes, block_cap)
    grid = pl.cdiv(B, tb)
    b_pad = grid * tb

    # Targets are tiny (4 B/row); pad to grid*tb so the in-kernel dynamic slice
    # is always in bounds.  (Padded rows are masked to zero loss in-kernel and
    # their output rows are discarded.)
    tgt_p = jnp.pad(targets, ((0, b_pad - B), (0, 0)))

    kernel = functools.partial(
        _adv_loss_kernel,
        kappa=float(kappa),
        num_valid_rows=B,
        tb=tb,
        k=K,
    )

    # VMEM budget: double-buffered logits blocks + ~4 block-sized f32/i32
    # temporaries (upcast, iota, two selects) + resident targets + headroom.
    in_block_bytes = tb * K * elem_bytes
    temp_bytes = 4 * tb * K * 4
    vmem_limit = 2 * in_block_bytes + temp_bytes + b_pad * 4 + (2 << 20)
    vmem_limit = int(min(max(vmem_limit, 16 << 20), (vmem_cap * 3) // 4))

    row_loss = pl.pallas_call(
        kernel,
        out_shape=jax.ShapeDtypeStruct((B, 1), jnp.float32),
        grid_spec=pltpu.PrefetchScalarGridSpec(
            num_scalar_prefetch=0,
            grid=(grid,),
            in_specs=[
                # Logits: native dtype, full K extent (no column padding).
                pl.BlockSpec((tb, K), lambda i: (i, 0)),
                # Targets: whole vector resident in VMEM (constant block index
                # -> DMA'd once, no per-step descriptor / double buffer).
                pl.BlockSpec((b_pad, 1), lambda i: (0, 0)),
            ],
            out_specs=pl.BlockSpec((tb, 1), lambda i: (i, 0)),
        ),
        compiler_params=pltpu.CompilerParams(
            dimension_semantics=("parallel",),
            vmem_limit_bytes=vmem_limit,
        ),
    )(logits, tgt_p)

    # Writeback is (B, 1) per-row losses (~1/K of input traffic); the mean is a
    # trivial reduction over B scalars.
    return jnp.sum(row_loss) / B


def _reference(logits, targets, kappa):
    B, K = logits.shape
    one_hot = jax.nn.one_hot(targets.reshape(-1), K, dtype=jnp.float32)
    logits = logits.astype(jnp.float32)
    real = jnp.sum(one_hot * logits, axis=1)
    other = jnp.max((1.0 - one_hot) * logits - one_hot * 10000.0, axis=1)
    return jnp.mean(jnp.maximum(real - other + kappa, 0.0))


if __name__ == "__main__":
    key = jax.random.PRNGKey(0)
    k1, k2, k3, k4 = jax.random.split(key, 4)

    # Case 1: ModelNet40-style classification logits, f32.
    B, K = 8, 40
    kappa = 0.5
    logits = jax.random.normal(k1, (B, K), dtype=jnp.float32) * 3.0
    targets = jax.random.randint(k2, (B,), 0, K, dtype=jnp.int32)

    out = untargeted_logits_adv_loss(logits, targets, kappa)
    out = jax.block_until_ready(out)
    ref = _reference(logits, targets, kappa)
    assert jnp.allclose(out, ref, atol=1e-5, rtol=1e-5), (out, ref)

    # Case 2: bf16 logits, batch not a multiple of the row tile (exercises the
    # native-dtype path and the partial-last-block row mask).
    B2, K2 = 50, 40
    logits2 = (jax.random.normal(k3, (B2, K2), dtype=jnp.float32) * 3.0
               ).astype(jnp.bfloat16)
    targets2 = jax.random.randint(k4, (B2,), 0, K2, dtype=jnp.int32)

    out2 = untargeted_logits_adv_loss(logits2, targets2, kappa)
    out2 = jax.block_until_ready(out2)
    ref2 = _reference(logits2.astype(jnp.float32), targets2, kappa)
    assert jnp.allclose(out2, ref2, atol=1e-4, rtol=1e-4), (out2, ref2)

    print("KERNEL_OK")
</pallas_src>

<mosaic_0001>
module attributes {stable_mosaic.version = 11 : i64} {
  func.func @_adv_loss_kernel(%arg0: i32, %arg1: memref<8x40xf32, #tpu.memory_space<vmem>>, %arg2: memref<8x1xi32, #tpu.memory_space<vmem>>, %arg3: memref<8x1xf32, #tpu.memory_space<vmem>>) attributes {dimension_semantics = [#tpu.dimension_semantics<parallel>], iteration_bounds = array<i64: 1>, scalar_prefetch = 0 : i64, scratch_operands = 0 : i64, tpu.core_type = #tpu.core_type<tc>, window_params = [{transform_indices = @transform_0, window_bounds = array<i64: 8, 40>}, {pipeline_mode = #tpu.pipeline_mode<synchronous>, transform_indices = @transform_1, window_bounds = array<i64: 8, 1>}, {transform_indices = @transform_2, window_bounds = array<i64: 8, 1>}]} {
    %c0 = arith.constant 0 : index
    %c0_0 = arith.constant 0 : index
    %0 = vector.load %arg1[%c0, %c0_0] : memref<8x40xf32, #tpu.memory_space<vmem>>, vector<8x40xf32>
    %c8_i32 = arith.constant 8 : i32
    %1 = arith.muli %arg0, %c8_i32 : i32
    %2 = tpu.assume_multiple %1, 8 : i32
    %3 = arith.index_cast %2 : i32 to index
    %c0_1 = arith.constant 0 : index
    %4 = vector.load %arg2[%3, %c0_1] : memref<8x1xi32, #tpu.memory_space<vmem>>, vector<8x1xi32>
    %5 = tpu.iota {dimensions = array<i32: 1>} : vector<8x40xi32>
    %6 = vector.broadcast %4 : vector<8x1xi32> to vector<8x40xi32>
    %7 = arith.cmpi eq, %5, %6 : vector<8x40xi32>
    %cst = arith.constant 0.000000e+00 : f32
    %8 = vector.broadcast %cst : f32 to vector<8x40xf32>
    %9 = arith.select %7, %0, %8 : vector<8x40xi1>, vector<8x40xf32>
    %cst_2 = arith.constant dense<0.000000e+00> : vector<8xf32>
    %10 = vector.multi_reduction <add>, %9, %cst_2 [1] : vector<8x40xf32> to vector<8xf32>
    %11 = vector.shape_cast %10 : vector<8xf32> to vector<8x1xf32>
    %cst_3 = arith.constant -1.000000e+04 : f32
    %12 = vector.broadcast %cst_3 : f32 to vector<8x40xf32>
    %13 = arith.select %7, %12, %0 : vector<8x40xi1>, vector<8x40xf32>
    %cst_4 = arith.constant dense<0xFF800000> : vector<8xf32>
    %14 = vector.multi_reduction <maximumf>, %13, %cst_4 [1] : vector<8x40xf32> to vector<8xf32>
    %15 = vector.shape_cast %14 : vector<8xf32> to vector<8x1xf32>
    %16 = arith.subf %11, %15 : vector<8x1xf32>
    %cst_5 = arith.constant 5.000000e-01 : f32
    %17 = vector.broadcast %cst_5 : f32 to vector<8x1xf32>
    %18 = arith.addf %16, %17 : vector<8x1xf32>
    %cst_6 = arith.constant 0.000000e+00 : f32
    %19 = vector.broadcast %cst_6 : f32 to vector<8x1xf32>
    %20 = arith.maximumf %18, %19 : vector<8x1xf32>
    %c8_i32_7 = arith.constant 8 : i32
    %21 = arith.muli %arg0, %c8_i32_7 : i32
    %22 = tpu.iota {dimensions = array<i32: 0>} : vector<8x1xi32>
    %23 = vector.broadcast %21 : i32 to vector<8x1xi32>
    %24 = arith.addi %23, %22 : vector<8x1xi32>
    %c8_i32_8 = arith.constant 8 : i32
    %25 = vector.broadcast %c8_i32_8 : i32 to vector<8x1xi32>
    %26 = arith.cmpi slt, %24, %25 : vector<8x1xi32>
    %cst_9 = arith.constant 0.000000e+00 : f32
    %27 = vector.broadcast %cst_9 : f32 to vector<8x1xf32>
    %28 = arith.select %26, %20, %27 : vector<8x1xi1>, vector<8x1xf32>
    %c0_10 = arith.constant 0 : index
    %c0_11 = arith.constant 0 : index
    %29 = vector.load %arg3[%c0_10, %c0_11] : memref<8x1xf32, #tpu.memory_space<vmem>>, vector<8x1xf32>
    tpu.vector_store %arg3[%c0_10, %c0_11], %28 {strides = array<i32>} : memref<8x1xf32, #tpu.memory_space<vmem>>, vector<8x1xf32>,
    return
  }
  func.func @transform_0(%arg0: i32) -> (i32, i32) {
    %c0_i32 = arith.constant 0 : i32
    %c0_i32_0 = arith.constant 0 : i32
    return %arg0, %c0_i32 : i32, i32
  }
  func.func @transform_1(%arg0: i32) -> (i32, i32) {
    %c0_i32 = arith.constant 0 : i32
    %c0_i32_0 = arith.constant 0 : i32
    %c0_i32_1 = arith.constant 0 : i32
    return %c0_i32, %c0_i32_0 : i32, i32
  }
  func.func @transform_2(%arg0: i32) -> (i32, i32) {
    %c0_i32 = arith.constant 0 : i32
    %c0_i32_0 = arith.constant 0 : i32
    return %arg0, %c0_i32 : i32, i32
  }
}

</mosaic_0001>

<llo_original>
// kernel: tpu_custom_call.1
$region0: #{tpu_custom_call.1}
  #allocation0 [shape = 'u32[]', space=smem, size = 0x4, offset = 0x4, fixed_abs, tag = 'smem constant byte address 0x4 - core index']
  #allocation1 [shape = 'u32[72,128]{1,0:T(1,128)}', space=vmem, size = 0x9000, scoped, tag = 'internal scratch']
  %s0 = inlined_call_operand.vmem [shape: f32[8,40], index: 0, kind: input, shape index: {}]
  %s1 = inlined_call_operand.vmem [shape: s32[8,1], index: 1, kind: input, shape index: {}]
  %s2 = inlined_call_operand.vmem [shape: f32[8,1], index: 2, kind: output, shape index: {}]
  %s3 = sld [smem:[#allocation0]]
  $region18: #{tpu_custom_call.1} parent=0
    _
  %s5 = ssub.s32 1, %s3
  %s6 = scalar_select 0, %s5, %s3
  // Predicated region
  $region2: #{tpu_custom_call.1} parent=0 // pred_check
    _
  $region3: #{tpu_custom_call.1} parent=0 // pred_check_branch
    %8 = sbr.rel (0) target = $region5
  $region4: #{tpu_custom_call.1} parent=0 // pred_region
    _
  $region5: #{tpu_custom_call.1} parent=0 // pred_fallthru
    _
  // Predicated region
  $region6: #{tpu_custom_call.1} parent=0 // pred_check
    _
  $region7: #{tpu_custom_call.1} parent=0 // pred_check_branch
    %10 = sbr.rel (0) target = $region9
  $region8: #{tpu_custom_call.1} parent=0 // pred_region
    _
  $region9: #{tpu_custom_call.1} parent=0 // pred_fallthru
    _
  %v11 = vld [vmem:[%s0] sm:$0xff]
  %s12 = smul.u32 0, 8
  %s13 = scalar_lea.vmem %s1, %s12
  %v14 = vld [vmem:[%s13] sm:$0xff]
  %v15 = vlaneseq
  %v16 = vand.u32 %v15, 127
  %17 = vset.pattern.permute.xlu0 0
  %18 = vperm.xlu0 %17, %v14
  %v19 = vpop.permute.xlu0 %18
  %vm20 = vcmp.eq.s32.totalorder %v16, %v19
  %v21 = vsel %vm20, %v11, 0.0
  %vm22 = vcmask 326656
  %v23 = vsel %vm22, %v21, 0.0
  %24 = vadd.xlane.f32.xlu0 %v23
  %v25 = vpop.xlane.xlu0 %24
  %v26 = vsel %vm20, -10000.0, %v11
  %v27 = vsel %vm22, %v26, -inf
  %28 = vmax.xlane.f32.xlu0 %v27
  %v29 = vpop.xlane.xlu0 %28
  %v30 = vsub.f32 %v25, %v29
  %v31 = vadd.f32 %v30, 0.5
  %v32 = vmax.f32 %v31, 0.0
  %v33 = vlaneseq
  %v34 = vshrl.u32 %v33, 7
  %v35 = vstv %s12
  %v36 = vadd.s32 %v35, %v34
  %vm37 = vcmp.lt.s32.totalorder %v36, 8
  %v38 = vsel %vm37, %v32, 0.0
  %vm39 = vcmask 7168
  %40 = vst.msk [vmem:[%s2] sm:$0xff] %vm39, %v38
  // Predicated region
  $region10: #{tpu_custom_call.1} parent=0 // pred_check
    _
  $region11: #{tpu_custom_call.1} parent=0 // pred_check_branch
    %42 = sbr.rel (0) target = $region13
  $region12: #{tpu_custom_call.1} parent=0 // pred_region
    _
  $region13: #{tpu_custom_call.1} parent=0 // pred_fallthru
    _
  // Predicated region
  $region14: #{tpu_custom_call.1} parent=0 // pred_check
    _
  $region15: #{tpu_custom_call.1} parent=0 // pred_check_branch
    %44 = sbr.rel (0) target = $region17
  $region16: #{tpu_custom_call.1} parent=0 // pred_region
    _
  $region17: #{tpu_custom_call.1} parent=0 // pred_fallthru
    _

</llo_original>
